<compile_context>
chip_gen: v7x
topology: tpu7x:2x2x1
jax: 0.10.0
libtpu: 0.0.40
codegen_flags: <defaults>
</compile_context>

<pallas_src>
import jax
import jax.numpy as jnp
from jax.experimental import pallas as pl
from jax.experimental.pallas import tpu as pltpu


def _round_up(x: int, m: int) -> int:
    return ((x + m - 1) // m) * m


# Conservative double-buffered VMEM budget that works on every generation
# (v7x: 64 MiB physical / 32 MiB default scoped; v6e: 128/32; v5e: 128/16).
_VMEM_BUDGET = 24 * 1024 * 1024
_VMEM_LIMIT = 32 * 1024 * 1024


def zero_layer_kernel(emb_ref, w_o_ref, bias_ref, out_ref):
    # emb_ref  : (TM, D)  bf16   gathered embeddings (row tile, or fully resident)
    # w_o_ref  : (TN, D)  bf16   W_O rows for this vocab tile (PyTorch layout)
    # bias_ref : (1, TN)  f32
    # out_ref  : (TM, TN) f32
    logits = jax.lax.dot_general(
        emb_ref[...], w_o_ref[...],
        dimension_numbers=(((1,), (1,)), ((), ())),   # contract on D for both
        preferred_element_type=jnp.float32)           # f32 MXU accumulation
    out_ref[...] = logits + bias_ref[...]             # f32 bias epilogue


def _vmem_bytes(tm: int, tn: int, d: int) -> int:
    # Double-buffered inputs (bf16) + double-buffered f32 output tile.
    return (2 * tm * d * 2        # emb tile
            + 2 * tn * d * 2      # W_O tile
            + 2 * tn * 4          # bias tile
            + 2 * tm * tn * 4)    # output tile


def _select_config(bt_al: int, vocab: int, d: int):
    """Returns (mode, tm, tn). mode='resident' keeps emb fully in VMEM."""
    v_al = _round_up(vocab, 128)

    # Mode 1: emb fully resident -> 1-D grid over vocab; W_O streams exactly once.
    for tn in (1024, 512, 256, 128):
        tn = min(tn, v_al)
        if _vmem_bytes(bt_al, tn, d) <= _VMEM_BUDGET:
            return "resident", bt_al, tn

    # Mode 2: 2-D grid; largest row tile that fits -> fewest W_O restreams.
    for tm in (1024, 512, 256, 128, 64, 32, 16, 8):
        tm = min(tm, bt_al)
        for tn in (1024, 512, 256, 128):
            tn = min(tn, v_al)
            if _vmem_bytes(tm, tn, d) <= _VMEM_BUDGET:
                return "tiled", tm, tn

    # Last resort for pathological d_model; let the compiler sort VMEM out.
    return "tiled", min(8, bt_al), 128


def zero_layer_forward(tokens, w_e, w_o_weight, w_o_bias):
    """tokens: (B, T) int. Returns (logits (B, T, vocab) float32, None)."""
    B, T = tokens.shape
    vocab, d_model = w_e.shape
    BT = B * T
    bt_al = _round_up(BT, 8)

    mode, tm, tn = _select_config(bt_al, vocab, d_model)
    bt_pad = _round_up(bt_al, tm)            # == bt_al in resident mode
    v_pad = _round_up(vocab, tn)

    # Embedding gather + bf16 cast in the wrapper (~BT*D bytes, essentially free).
    # (jnp.take clamps out-of-range ids instead of erroring like nn.Embedding.)
    emb = jnp.take(w_e, tokens.reshape(BT).astype(jnp.int32), axis=0)
    emb = emb.astype(jnp.bfloat16)
    if bt_pad != BT:
        emb = jnp.pad(emb, ((0, bt_pad - BT), (0, 0)))

    # One-time bf16 cast of W_O (halves all HBM weight traffic in the kernel);
    # pad only if vocab is not tile-aligned (then it fuses into the cast copy).
    w_o_p = w_o_weight.astype(jnp.bfloat16)
    bias_p = w_o_bias.astype(jnp.float32)
    if v_pad != vocab:
        w_o_p = jnp.pad(w_o_p, ((0, v_pad - vocab), (0, 0)))
        bias_p = jnp.pad(bias_p, (0, v_pad - vocab))
    bias_p = bias_p.reshape(1, v_pad)

    n_row_tiles = bt_pad // tm
    n_col_tiles = v_pad // tn

    if mode == "resident":
        grid = (n_col_tiles,)
        in_specs = [
            pl.BlockSpec((bt_pad, d_model), lambda j: (0, 0)),   # emb, resident
            pl.BlockSpec((tn, d_model), lambda j: (j, 0)),       # W_O vocab tile
            pl.BlockSpec((1, tn), lambda j: (0, j)),             # bias slice
        ]
        out_specs = pl.BlockSpec((bt_pad, tn), lambda j: (0, j))
        dim_sem = ("parallel",)
    else:
        grid = (n_row_tiles, n_col_tiles)
        in_specs = [
            pl.BlockSpec((tm, d_model), lambda i, j: (i, 0)),
            pl.BlockSpec((tn, d_model), lambda i, j: (j, 0)),
            pl.BlockSpec((1, tn), lambda i, j: (0, j)),
        ]
        out_specs = pl.BlockSpec((tm, tn), lambda i, j: (i, j))
        dim_sem = ("parallel", "parallel")

    cost = pl.CostEstimate(
        flops=2 * bt_pad * d_model * v_pad,
        transcendentals=0,
        bytes_accessed=(bt_pad * d_model * 2                       # emb read (once)
                        + n_row_tiles * v_pad * d_model * 2        # W_O per row tile
                        + n_row_tiles * v_pad * 4                  # bias per row tile
                        + bt_pad * v_pad * 4))                     # logits write

    logits_flat = pl.pallas_call(
        zero_layer_kernel,
        out_shape=jax.ShapeDtypeStruct((bt_pad, v_pad), jnp.float32),
        grid=grid,
        in_specs=in_specs,
        out_specs=out_specs,
        compiler_params=pltpu.CompilerParams(
            dimension_semantics=dim_sem,
            vmem_limit_bytes=_VMEM_LIMIT),
        cost_estimate=cost,
    )(emb, w_o_p, bias_p)

    logits = logits_flat[:BT, :vocab].reshape(B, T, vocab)

    # TODO(synk): cross-entropy loss branch (targets is not None) not needed for
    # the targets=None forward; omitted here.
    return logits, None


def _reference(tokens, w_e, w_o_weight, w_o_bias):
    return jnp.take(w_e, tokens, axis=0) @ w_o_weight.T + w_o_bias


if __name__ == "__main__":
    key = jax.random.PRNGKey(0)

    # Case 1: small deterministic setup matching the module (B=2, T=8, D=32, V=64).
    B, T, d_model, vocab_size = 2, 8, 32, 64
    k_tok, k_we, k_wo, k_b, key = jax.random.split(key, 5)
    tokens = jax.random.randint(k_tok, (B, T), 0, vocab_size, dtype=jnp.int32)
    w_e = jax.random.normal(k_we, (vocab_size, d_model), jnp.float32) * 0.02
    w_o_weight = jax.random.normal(k_wo, (vocab_size, d_model), jnp.float32) * 0.02
    w_o_bias = jax.random.normal(k_b, (vocab_size,), jnp.float32) * 0.01

    logits, loss = zero_layer_forward(tokens, w_e, w_o_weight, w_o_bias)
    logits = jax.block_until_ready(logits)
    ref = _reference(tokens, w_e, w_o_weight, w_o_bias)
    assert logits.shape == (B, T, vocab_size)
    # bf16 MXU operands (intentional) => relaxed tolerance vs f32 reference.
    assert jnp.allclose(logits, ref, atol=2e-3, rtol=2e-2), \
        float(jnp.max(jnp.abs(logits - ref)))
    assert loss is None

    # Case 2: non-aligned vocab / BT to exercise the padding + slicing paths.
    B2, T2, d2, v2 = 3, 13, 48, 200
    k_tok, k_we, k_wo, k_b, key = jax.random.split(key, 5)
    tokens2 = jax.random.randint(k_tok, (B2, T2), 0, v2, dtype=jnp.int32)
    w_e2 = jax.random.normal(k_we, (v2, d2), jnp.float32) * 0.02
    w_o_w2 = jax.random.normal(k_wo, (v2, d2), jnp.float32) * 0.02
    w_o_b2 = jax.random.normal(k_b, (v2,), jnp.float32) * 0.01

    logits2, _ = zero_layer_forward(tokens2, w_e2, w_o_w2, w_o_b2)
    logits2 = jax.block_until_ready(logits2)
    ref2 = _reference(tokens2, w_e2, w_o_w2, w_o_b2)
    assert logits2.shape == (B2, T2, v2)
    assert jnp.allclose(logits2, ref2, atol=2e-3, rtol=2e-2), \
        float(jnp.max(jnp.abs(logits2 - ref2)))

    print("KERNEL_OK")
</pallas_src>

<mosaic_0001>
module attributes {stable_mosaic.version = 11 : i64} {
  func.func @zero_layer_kernel(%arg0: i32, %arg1: memref<16x32xbf16, #tpu.memory_space<vmem>>, %arg2: memref<128x32xbf16, #tpu.memory_space<vmem>>, %arg3: memref<1x128xf32, #tpu.memory_space<vmem>>, %arg4: memref<16x128xf32, #tpu.memory_space<vmem>>) attributes {dimension_semantics = [#tpu.dimension_semantics<parallel>], iteration_bounds = array<i64: 1>, scalar_prefetch = 0 : i64, scratch_operands = 0 : i64, tpu.core_type = #tpu.core_type<tc>, window_params = [{pipeline_mode = #tpu.pipeline_mode<synchronous>, transform_indices = @transform_0, window_bounds = array<i64: 16, 32>}, {transform_indices = @transform_1, window_bounds = array<i64: 128, 32>}, {transform_indices = @transform_2, window_bounds = array<i64: 1, 128>}, {transform_indices = @transform_3, window_bounds = array<i64: 16, 128>}]} {
    %c0 = arith.constant 0 : index
    %c0_0 = arith.constant 0 : index
    %0 = vector.load %arg1[%c0, %c0_0] : memref<16x32xbf16, #tpu.memory_space<vmem>>, vector<16x32xbf16>
    %c0_1 = arith.constant 0 : index
    %c0_2 = arith.constant 0 : index
    %1 = vector.load %arg2[%c0_1, %c0_2] : memref<128x32xbf16, #tpu.memory_space<vmem>>, vector<128x32xbf16>
    %cst = arith.constant dense<0.000000e+00> : vector<16x128xf32>
    %2 = tpu.matmul %0, %1, %cst {dimension_numbers = #tpu.dot_dimension_numbers<[1], [1], [0], [0], [0, 0, 1, 0], [], []>} : vector<16x32xbf16>, vector<128x32xbf16>, vector<16x128xf32> -> vector<16x128xf32>
    %c0_3 = arith.constant 0 : index
    %c0_4 = arith.constant 0 : index
    %3 = vector.load %arg3[%c0_3, %c0_4] : memref<1x128xf32, #tpu.memory_space<vmem>>, vector<1x128xf32>
    %4 = vector.broadcast %3 : vector<1x128xf32> to vector<16x128xf32>
    %5 = arith.addf %2, %4 : vector<16x128xf32>
    %c0_5 = arith.constant 0 : index
    %c0_6 = arith.constant 0 : index
    %6 = vector.load %arg4[%c0_5, %c0_6] : memref<16x128xf32, #tpu.memory_space<vmem>>, vector<16x128xf32>
    tpu.vector_store %arg4[%c0_5, %c0_6], %5 {strides = array<i32>} : memref<16x128xf32, #tpu.memory_space<vmem>>, vector<16x128xf32>,
    return
  }
  func.func @transform_0(%arg0: i32) -> (i32, i32) {
    %c0_i32 = arith.constant 0 : i32
    %c0_i32_0 = arith.constant 0 : i32
    %c0_i32_1 = arith.constant 0 : i32
    return %c0_i32, %c0_i32_0 : i32, i32
  }
  func.func @transform_1(%arg0: i32) -> (i32, i32) {
    %c0_i32 = arith.constant 0 : i32
    %c0_i32_0 = arith.constant 0 : i32
    return %arg0, %c0_i32 : i32, i32
  }
  func.func @transform_2(%arg0: i32) -> (i32, i32) {
    %c0_i32 = arith.constant 0 : i32
    %c0_i32_0 = arith.constant 0 : i32
    return %c0_i32, %arg0 : i32, i32
  }
  func.func @transform_3(%arg0: i32) -> (i32, i32) {
    %c0_i32 = arith.constant 0 : i32
    %c0_i32_0 = arith.constant 0 : i32
    return %c0_i32, %arg0 : i32, i32
  }
}

</mosaic_0001>

<llo_original>
// kernel: tpu_custom_call.1
$region0: #{tpu_custom_call.1}
  #allocation0 [shape = 'u32[]', space=smem, size = 0x4, offset = 0x4, fixed_abs, tag = 'smem constant byte address 0x4 - core index']
  #allocation1 [shape = 'u32[144,128]{1,0:T(1,128)}', space=vmem, size = 0x12000, scoped, tag = 'internal scratch']
  %s0 = inlined_call_operand.vmem [shape: bf16[16,32], index: 0, kind: input, shape index: {}]
  %s1 = inlined_call_operand.vmem [shape: bf16[128,32], index: 1, kind: input, shape index: {}]
  %s2 = inlined_call_operand.vmem [shape: f32[1,128], index: 2, kind: input, shape index: {}]
  %s3 = inlined_call_operand.hbm [shape: f32[16,128], index: 3, kind: output, shape index: {}]
  %s4 = sld [smem:[#allocation0]]
  $region22: #{tpu_custom_call.1} parent=0
    _
  %s6 = ssub.s32 1, %s4
  %s7 = scalar_select 0, %s6, %s4
  $region1: #{tpu_custom_call.1} parent=0
    #allocation2 [shape = 'u8[8192]{0}', space=vmem, size = 0x2000, scoped, tag = 'output window, operand 0, single buffered']
    #allocation3 [shape = 's32[1]{0}', space=sflag, size = 0x4, scoped, tag = 'scoped memory for tpu_custom_call.1']
    %8 = vsyncpa [#allocation3], 0
    // Predicated region
    $region2: #{tpu_custom_call.1} parent=1 // pred_check
      _
    $region3: #{tpu_custom_call.1} parent=1 // pred_check_branch
      %10 = sbr.rel (0) target = $region5
    $region4: #{tpu_custom_call.1} parent=1 // pred_region
      _
    $region5: #{tpu_custom_call.1} parent=1 // pred_fallthru
      _
    // Predicated region
    $region6: #{tpu_custom_call.1} parent=1 // pred_check
      _
    $region7: #{tpu_custom_call.1} parent=1 // pred_check_branch
      %12 = sbr.rel (0) target = $region9
    $region8: #{tpu_custom_call.1} parent=1 // pred_region
      _
    $region9: #{tpu_custom_call.1} parent=1 // pred_fallthru
      _
    // Predicated region
    $region10: #{tpu_custom_call.1} parent=1 // pred_check
      _
    $region11: #{tpu_custom_call.1} parent=1 // pred_check_branch
      %14 = sbr.rel (0) target = $region13
    $region12: #{tpu_custom_call.1} parent=1 // pred_region
      _
    $region13: #{tpu_custom_call.1} parent=1 // pred_fallthru
      _
    %v16 = vld [vmem:[%s0] sm:$0xf]
    %v17 = vld [vmem:[%s0 + $0x4] sm:$0xf]
    %v18 = vld [vmem:[%s1] sm:$0xf]
    %v19 = vld [vmem:[%s1 + $0x4] sm:$0xf]
    %v20 = vld [vmem:[%s1 + $0x8] sm:$0xf]
    %v21 = vld [vmem:[%s1 + $0xc] sm:$0xf]
    %v22 = vld [vmem:[%s1 + $0x10] sm:$0xf]
    %v23 = vld [vmem:[%s1 + $0x14] sm:$0xf]
    %v24 = vld [vmem:[%s1 + $0x18] sm:$0xf]
    %v25 = vld [vmem:[%s1 + $0x1c] sm:$0xf]
    %v26 = vld [vmem:[%s1 + $0x20] sm:$0xf]
    %v27 = vld [vmem:[%s1 + $0x24] sm:$0xf]
    %v28 = vld [vmem:[%s1 + $0x28] sm:$0xf]
    %v29 = vld [vmem:[%s1 + $0x2c] sm:$0xf]
    %v30 = vld [vmem:[%s1 + $0x30] sm:$0xf]
    %v31 = vld [vmem:[%s1 + $0x34] sm:$0xf]
    %v32 = vld [vmem:[%s1 + $0x38] sm:$0xf]
    %v33 = vld [vmem:[%s1 + $0x3c] sm:$0xf]
    %v34 = vld [vmem:[%s2] sm:$0x1]
    %v36 = vlaneseq
    %v37 = vshrl.u32 %v36, 7
    %v38 = vsub.s32 0, %v37
    %v39 = vrot.slane %v34, %v38
    %v43 = vunpack.c.l.b16 %v16
    %v44 = vunpack.c.l.b16 %v17
    %v45 = vpack.c.b16 %v44, %v43
    %v62 = vunpack.c.l.b16 %v18
    %v63 = vunpack.c.l.b16 %v19
    %v64 = vunpack.c.l.b16 %v20
    %v65 = vunpack.c.l.b16 %v21
    %v66 = vunpack.c.l.b16 %v22
    %v67 = vunpack.c.l.b16 %v23
    %v68 = vunpack.c.l.b16 %v24
    %v69 = vunpack.c.l.b16 %v25
    %v70 = vunpack.c.l.b16 %v26
    %v71 = vunpack.c.l.b16 %v27
    %v72 = vunpack.c.l.b16 %v28
    %v73 = vunpack.c.l.b16 %v29
    %v74 = vunpack.c.l.b16 %v30
    %v75 = vunpack.c.l.b16 %v31
    %v76 = vunpack.c.l.b16 %v32
    %v77 = vunpack.c.l.b16 %v33
    %v78 = vpack.c.b16 %v63, %v62
    %v79 = vpack.c.b16 %v65, %v64
    %v80 = vpack.c.b16 %v67, %v66
    %v81 = vpack.c.b16 %v69, %v68
    %v82 = vpack.c.b16 %v71, %v70
    %v83 = vpack.c.b16 %v73, %v72
    %v84 = vpack.c.b16 %v75, %v74
    %v85 = vpack.c.b16 %v77, %v76
    %vm86 = vcmask 261120
    %v88 = vsel %vm86, %v45, 0
    %v91 = vsel %vm86, %v78, 0
    %v94 = vsel %vm86, %v79, 0
    %v97 = vsel %vm86, %v80, 0
    %v100 = vsel %vm86, %v81, 0
    %v103 = vsel %vm86, %v82, 0
    %v106 = vsel %vm86, %v83, 0
    %v109 = vsel %vm86, %v84, 0
    %v112 = vsel %vm86, %v85, 0
    %114 = vmatprep.subr.bf16.mxu0 0
    %115 = vmatpush1.bf16.xpose.msra.mxu0 %v91
    %116 = vmatprep.subr.bf16.mxu0 0
    %117 = vmatpush1.bf16.xpose.msra.mxu0 %v94
    %118 = vmatprep.subr.bf16.mxu0 0
    %119 = vmatpush1.bf16.xpose.msra.mxu0 %v97
    %120 = vmatprep.subr.bf16.mxu0 0
    %121 = vmatpush1.bf16.xpose.msra.mxu0 %v100
    %122 = vmatprep.subr.bf16.mxu0 0
    %123 = vmatpush1.bf16.xpose.msra.mxu0 %v103
    %124 = vmatprep.subr.bf16.mxu0 0
    %125 = vmatpush1.bf16.xpose.msra.mxu0 %v106
    %126 = vmatprep.subr.bf16.mxu0 0
    %127 = vmatpush1.bf16.xpose.msra.mxu0 %v109
    %128 = vmatprep.subr.bf16.mxu0 0
    %129 = vmatpush1.bf16.xpose.msra.mxu0 %v112
    %130 = vmatprep.subr.bf16.mxu0 0
    %131 = vmatpush1.bf16.xpose.msra.mxu0 0
    %132 = vmatprep.subr.bf16.mxu0 0
    %133 = vmatpush1.bf16.xpose.msra.mxu0 0
    %134 = vmatprep.subr.bf16.mxu0 0
    %135 = vmatpush1.bf16.xpose.msra.mxu0 0
    %136 = vmatprep.subr.bf16.mxu0 0
    %137 = vmatpush1.bf16.xpose.msra.mxu0 0
    %138 = vmatprep.subr.bf16.mxu0 0
    %139 = vmatpush1.bf16.xpose.msra.mxu0 0
    %140 = vmatprep.subr.bf16.mxu0 0
    %141 = vmatpush1.bf16.xpose.msra.mxu0 0
    %142 = vmatprep.subr.bf16.mxu0 0
    %143 = vmatpush1.bf16.xpose.msra.mxu0 0
    %144 = vmatprep.subr.bf16.mxu0 0
    %145 = vmatpush1.bf16.xpose.msra.mxu0 0
    %146 = vmatprep.mubr.bf16.mxu0 0
    %147 = vmatmul.mubr.bf16.gmra.mrb[0].mxu0 %v88
    %v148 = vpop.f32.mrb[0].mxu0
    %v149 = vadd.f32 %v39, %v148
    %v150 = vpop.f32.mrb[0].mxu0
    %v151 = vpop.f32.mrb[0].mxu0
    %v152 = vadd.f32 %v39, %v151
    %v153 = vpop.f32.mrb[0].mxu0
    %154 = vdwg.mxu0
    %155 = vst [vmem:[#allocation2] sm:$0xff] %v149
    %156 = vst [vmem:[#allocation2 + $0x8] sm:$0xff] %v152
    // Predicated region
    $region14: #{tpu_custom_call.1} parent=1 // pred_check
      _
    $region15: #{tpu_custom_call.1} parent=1 // pred_check_branch
      %158 = sbr.rel (0) target = $region17
    $region16: #{tpu_custom_call.1} parent=1 // pred_region
      %s160 = ssub.s32 256, 256
      %161 = vsyncadd [#allocation3], %s160
      %s162 = sshll.u32 [#allocation2], 4
      %s163 = int_to_ptr.vmem [resolvable:$true] %s162
      %168 = dma.vmem_to_hbm [thread:$0]  %s163, 256, %s3, [#allocation3], 128, 128, 8
    $region17: #{tpu_custom_call.1} parent=1 // pred_fallthru
      _
    // Predicated region
    $region18: #{tpu_custom_call.1} parent=1 // pred_check
      _
    $region19: #{tpu_custom_call.1} parent=1 // pred_check_branch
      %170 = sbr.rel (0) target = $region21
    $region20: #{tpu_custom_call.1} parent=1 // pred_region
      %171 = dma.done [#allocation3], 256
    $region21: #{tpu_custom_call.1} parent=1 // pred_fallthru
      _
    %172 = vsyncpa [#allocation3], 1

</llo_original>
